<compile_context>
chip_gen: v6e
topology: v6e:2x2x1
jax: 0.10.0
libtpu: 0.0.40
codegen_flags: <defaults>
</compile_context>

<pallas_src>
import jax
import jax.numpy as jnp
from jax.experimental import pallas as pl
from jax.experimental.pallas import tpu as pltpu


def _make_partial_sums_kernel(tl, valid_cols, needs_mask):
    """Accumulate per-row sum(p*t) and sum(p)+sum(t) over the column grid axis."""

    def kernel(p_ref, t_ref, num_ref, den_ref):
        c = pl.program_id(1)

        @pl.when(c == 0)
        def _init():
            num_ref[...] = jnp.zeros_like(num_ref)
            den_ref[...] = jnp.zeros_like(den_ref)

        # Cast inside the kernel (VPU) so HBM traffic stays in the native dtype.
        p = p_ref[...].astype(jnp.float32)
        t = t_ref[...].astype(jnp.float32)

        def accumulate(pv, tv):
            num_ref[...] += jnp.sum(pv * tv, axis=1, keepdims=True)
            den_ref[...] += jnp.sum(pv + tv, axis=1, keepdims=True)

        if needs_mask:
            last = pl.num_programs(1) - 1

            @pl.when(c != last)
            def _interior():
                accumulate(p, t)

            @pl.when(c == last)
            def _tail():
                # Zero out-of-range lanes of BOTH inputs so the sums stay exact.
                lane = jax.lax.broadcasted_iota(jnp.int32, p.shape, 1)
                valid = (c * tl + lane) < valid_cols
                accumulate(jnp.where(valid, p, 0.0), jnp.where(valid, t, 0.0))
        else:
            accumulate(p, t)

    return kernel


def _chip_config():
    """Return (vmem_limit_bytes, double-buffered input byte budget, single_tc)."""
    try:
        kind = jax.devices()[0].device_kind.lower()
    except Exception:
        kind = ""
    if "v7" in kind:
        # v7x: 64 MiB physical VMEM per TC, 2 TCs -> conservative budget,
        # keep >=2 row blocks so the 'parallel' axis feeds both cores.
        return 32 * 1024 * 1024, 24 * 1024 * 1024, False
    if ("v5e" in kind) or ("v5 lite" in kind) or ("v5lite" in kind) or ("v6" in kind):
        # Single-TC parts with 128 MiB physical VMEM: fewer, larger grid steps.
        return 64 * 1024 * 1024, 48 * 1024 * 1024, True
    # Unknown / other chips: conservative limits, treat as single-TC.
    return 32 * 1024 * 1024, 24 * 1024 * 1024, True


def _pick_row_block(rows, pack, single_tc, budget, isz):
    """Row block: full extent on single-TC chips, >=2 blocks on v7x when possible."""
    # Cap so even a minimum-width (128-lane) double-buffered tile fits VMEM.
    hard_cap = max(pack, (budget // (2 * 128 * isz)) // pack * pack)
    if single_tc or rows < 2 * pack:
        rb = min(rows, hard_cap)
    else:
        rb = min(rows // 2, hard_cap)
    if rb >= rows:
        return rows
    rb = max(pack, (rb // pack) * pack)
    while rb > pack and rows % rb != 0:
        rb -= pack
    return rb if rows % rb == 0 else rows


def binary_dice_loss(predict, target, smooth=1.0, p=2, reduction='mean',
                     *, _max_lanes_per_block=None):
    # NOTE: `p` and `reduction` are accepted for parity with the PyTorch module
    # but -- exactly as in the original dodnet forward -- they do not affect the
    # result (den uses plain sums; the masked mean over valid samples is always
    # applied).
    assert predict.shape[0] == target.shape[0], \
        "predict & target batch size don't match"
    B = predict.shape[0]
    L = 1
    for d in predict.shape[1:]:
        L *= d

    # Sublane fill matched to the packed vreg height of the narrowest dtype
    # (f32 -> 8, bf16 -> 16, int8/fp8 -> 32).
    min_isz = min(predict.dtype.itemsize, target.dtype.itemsize)
    pack = max(8, 32 // max(1, int(min_isz)))
    S = 1
    cand = pack
    while cand >= 2:
        if L % cand == 0:
            S = cand
            break
        cand //= 2
    rows = B * S
    Lr = L // S

    # Row-major reshapes only (no HBM copy, no dtype cast in the wrapper).
    pr = predict.reshape(rows, Lr)
    tg = target.reshape(rows, Lr)

    vmem_limit, vmem_budget, single_tc = _chip_config()
    isz = pr.dtype.itemsize + tg.dtype.itemsize
    row_block = _pick_row_block(rows, pack, single_tc, vmem_budget, isz)
    g_rows = rows // row_block
    # TODO(synk): when g_rows == 1 on v7x, additionally split the column axis
    # 2-way across the 'parallel' grid axis so the second TensorCore is used.

    # Column tile sized by the double-buffered VMEM budget (2 inputs x 2 bufs),
    # multiple of 128; no artificial lane cap (only an optional test override).
    tl = vmem_budget // (2 * row_block * isz)
    if _max_lanes_per_block is not None:
        tl = min(tl, int(_max_lanes_per_block))
    tl = max(128, (int(tl) // 128) * 128)
    if tl >= Lr:
        tl = Lr                       # full-extent block: any size is legal
        g_cols = 1
        needs_mask = False
    else:
        g_cols = pl.cdiv(Lr, tl)
        needs_mask = (Lr % tl) != 0

    kernel = _make_partial_sums_kernel(tl, Lr, needs_mask)

    bytes_accessed = (pr.size * pr.dtype.itemsize
                      + tg.size * tg.dtype.itemsize
                      + 2 * rows * 4)
    cost = pl.CostEstimate(flops=int(4 * rows * Lr), transcendentals=0,
                           bytes_accessed=int(bytes_accessed))

    out_shape = (
        jax.ShapeDtypeStruct((rows, 1), jnp.float32),
        jax.ShapeDtypeStruct((rows, 1), jnp.float32),
    )

    num_r, den_r = pl.pallas_call(
        kernel,
        out_shape=out_shape,
        grid_spec=pltpu.PrefetchScalarGridSpec(
            num_scalar_prefetch=0,
            grid=(g_rows, g_cols),
            in_specs=[
                pl.BlockSpec((row_block, tl), lambda r, c: (r, c)),
                pl.BlockSpec((row_block, tl), lambda r, c: (r, c)),
            ],
            out_specs=[
                pl.BlockSpec((row_block, 1), lambda r, c: (r, 0)),
                pl.BlockSpec((row_block, 1), lambda r, c: (r, 0)),
            ],
        ),
        compiler_params=pltpu.CompilerParams(
            dimension_semantics=("parallel", "arbitrary"),
            vmem_limit_bytes=vmem_limit,
        ),
        cost_estimate=cost,
    )(pr, tg)

    # Fold the S sub-rows of each sample; finish the tiny O(B) dice math in
    # plain JAX (free in XLA).
    num = num_r.reshape(B, S).sum(axis=1)
    den = den_r.reshape(B, S).sum(axis=1) + jnp.float32(smooth)
    dice_loss = 1.0 - 2.0 * num / den

    # Valid-sample mask: target[:, 0] != -1 on the flattened target.
    col0 = target.reshape(B, L)[:, 0]
    valid = col0 != -1
    # Masked mean over valid samples (0/0 -> NaN when none are valid, as in torch).
    masked_sum = jnp.sum(jnp.where(valid, dice_loss, 0.0))
    return masked_sum / jnp.sum(valid.astype(jnp.float32))


def _reference(predict, target, smooth=1.0):
    B = predict.shape[0]
    pr = predict.reshape(B, -1).astype(jnp.float32)
    tg = target.reshape(B, -1).astype(jnp.float32)
    num = jnp.sum(pr * tg, axis=1)
    den = jnp.sum(pr, axis=1) + jnp.sum(tg, axis=1) + smooth
    dice_loss = 1.0 - 2.0 * num / den
    valid = tg[:, 0] != -1.0
    return (jnp.sum(jnp.where(valid, dice_loss, 0.0))
            / jnp.sum(valid.astype(jnp.float32)))


if __name__ == "__main__":
    key = jax.random.PRNGKey(0)
    kp, kt, kp2, kt2, kp3, kt3 = jax.random.split(key, 6)

    # Case 1: the module's natural NCHW shapes, f32, single column block.
    B, C, H, W = 2, 4, 16, 16
    predict = jax.nn.sigmoid(jax.random.normal(kp, (B, C, H, W), jnp.float32))
    target = (jax.random.uniform(kt, (B, C, H, W)) > 0.5).astype(jnp.float32)
    loss = jax.block_until_ready(
        binary_dice_loss(predict, target, smooth=1.0, p=2, reduction='mean'))
    ref = _reference(predict, target, smooth=1.0)
    assert jnp.allclose(loss, ref, atol=1e-5, rtol=1e-5), (loss, ref)

    # Case 2: odd sizes + forced tiny column tile -> multi-block accumulation,
    # pl.when-gated tail masking, and the ignored-sample (-1) mask.
    B2, C2, H2, W2 = 2, 3, 9, 9
    predict2 = jax.nn.sigmoid(jax.random.normal(kp2, (B2, C2, H2, W2), jnp.float32))
    target2 = (jax.random.uniform(kt2, (B2, C2, H2, W2)) > 0.5).astype(jnp.float32)
    target2 = target2.at[1, 0, 0, 0].set(-1.0)   # sample 1 is ignored
    loss2 = jax.block_until_ready(
        binary_dice_loss(predict2, target2, smooth=1.0, _max_lanes_per_block=128))
    ref2 = _reference(predict2, target2, smooth=1.0)
    assert jnp.allclose(loss2, ref2, atol=1e-5, rtol=1e-5), (loss2, ref2)

    # Case 3: bf16 inputs (packed sublane height 16) + multi-block, no tail mask.
    B3, C3, H3, W3 = 2, 8, 32, 32
    predict3 = jax.nn.sigmoid(
        jax.random.normal(kp3, (B3, C3, H3, W3), jnp.float32)).astype(jnp.bfloat16)
    target3 = (jax.random.uniform(kt3, (B3, C3, H3, W3)) > 0.5).astype(jnp.bfloat16)
    loss3 = jax.block_until_ready(
        binary_dice_loss(predict3, target3, smooth=1.0, _max_lanes_per_block=128))
    ref3 = _reference(predict3, target3, smooth=1.0)
    assert jnp.allclose(loss3, ref3, atol=1e-4, rtol=1e-4), (loss3, ref3)

    print("KERNEL_OK")
</pallas_src>

<mosaic_0001>
module attributes {stable_mosaic.version = 11 : i64} {
  func.func @kernel(%arg0: i32, %arg1: i32, %arg2: memref<16x128xf32, #tpu.memory_space<vmem>>, %arg3: memref<16x128xf32, #tpu.memory_space<vmem>>, %arg4: memref<16x1xf32, #tpu.memory_space<vmem>>, %arg5: memref<16x1xf32, #tpu.memory_space<vmem>>) attributes {dimension_semantics = [#tpu.dimension_semantics<parallel>, #tpu.dimension_semantics<arbitrary>], iteration_bounds = array<i64: 1, 1>, scalar_prefetch = 0 : i64, scratch_operands = 0 : i64, tpu.core_type = #tpu.core_type<tc>, window_params = [{transform_indices = @transform_0, window_bounds = array<i64: 16, 128>}, {transform_indices = @transform_1, window_bounds = array<i64: 16, 128>}, {transform_indices = @transform_2, window_bounds = array<i64: 16, 1>}, {transform_indices = @transform_3, window_bounds = array<i64: 16, 1>}]} {
    %c0_i32 = arith.constant 0 : i32
    %0 = arith.cmpi eq, %arg1, %c0_i32 : i32
    %1 = arith.extui %0 : i1 to i32
    %c0_i32_0 = arith.constant 0 : i32
    %2 = arith.cmpi ne, %1, %c0_i32_0 : i32
    scf.if %2 {
      %cst_13 = arith.constant 0.000000e+00 : f32
      %17 = vector.broadcast %cst_13 : f32 to vector<16x1xf32>
      %c0_14 = arith.constant 0 : index
      %c0_15 = arith.constant 0 : index
      %18 = vector.load %arg4[%c0_14, %c0_15] : memref<16x1xf32, #tpu.memory_space<vmem>>, vector<16x1xf32>
      tpu.vector_store %arg4[%c0_14, %c0_15], %17 {strides = array<i32>} : memref<16x1xf32, #tpu.memory_space<vmem>>, vector<16x1xf32>,
      %cst_16 = arith.constant 0.000000e+00 : f32
      %19 = vector.broadcast %cst_16 : f32 to vector<16x1xf32>
      %c0_17 = arith.constant 0 : index
      %c0_18 = arith.constant 0 : index
      %20 = vector.load %arg5[%c0_17, %c0_18] : memref<16x1xf32, #tpu.memory_space<vmem>>, vector<16x1xf32>
      tpu.vector_store %arg5[%c0_17, %c0_18], %19 {strides = array<i32>} : memref<16x1xf32, #tpu.memory_space<vmem>>, vector<16x1xf32>,
    } else {
    }
    %c0 = arith.constant 0 : index
    %c0_1 = arith.constant 0 : index
    %3 = vector.load %arg2[%c0, %c0_1] : memref<16x128xf32, #tpu.memory_space<vmem>>, vector<16x128xf32>
    %c0_2 = arith.constant 0 : index
    %c0_3 = arith.constant 0 : index
    %4 = vector.load %arg3[%c0_2, %c0_3] : memref<16x128xf32, #tpu.memory_space<vmem>>, vector<16x128xf32>
    %c0_4 = arith.constant 0 : index
    %c0_5 = arith.constant 0 : index
    %5 = vector.load %arg4[%c0_4, %c0_5] : memref<16x1xf32, #tpu.memory_space<vmem>>, vector<16x1xf32>
    %6 = arith.mulf %3, %4 : vector<16x128xf32>
    %cst = arith.constant dense<0.000000e+00> : vector<16xf32>
    %7 = vector.multi_reduction <add>, %6, %cst [1] : vector<16x128xf32> to vector<16xf32>
    %8 = vector.shape_cast %7 : vector<16xf32> to vector<16x1xf32>
    %9 = arith.addf %5, %8 : vector<16x1xf32>
    %c0_6 = arith.constant 0 : index
    %c0_7 = arith.constant 0 : index
    %10 = vector.load %arg4[%c0_6, %c0_7] : memref<16x1xf32, #tpu.memory_space<vmem>>, vector<16x1xf32>
    tpu.vector_store %arg4[%c0_6, %c0_7], %9 {strides = array<i32>} : memref<16x1xf32, #tpu.memory_space<vmem>>, vector<16x1xf32>,
    %c0_8 = arith.constant 0 : index
    %c0_9 = arith.constant 0 : index
    %11 = vector.load %arg5[%c0_8, %c0_9] : memref<16x1xf32, #tpu.memory_space<vmem>>, vector<16x1xf32>
    %12 = arith.addf %3, %4 : vector<16x128xf32>
    %cst_10 = arith.constant dense<0.000000e+00> : vector<16xf32>
    %13 = vector.multi_reduction <add>, %12, %cst_10 [1] : vector<16x128xf32> to vector<16xf32>
    %14 = vector.shape_cast %13 : vector<16xf32> to vector<16x1xf32>
    %15 = arith.addf %11, %14 : vector<16x1xf32>
    %c0_11 = arith.constant 0 : index
    %c0_12 = arith.constant 0 : index
    %16 = vector.load %arg5[%c0_11, %c0_12] : memref<16x1xf32, #tpu.memory_space<vmem>>, vector<16x1xf32>
    tpu.vector_store %arg5[%c0_11, %c0_12], %15 {strides = array<i32>} : memref<16x1xf32, #tpu.memory_space<vmem>>, vector<16x1xf32>,
    return
  }
  func.func @transform_0(%arg0: i32, %arg1: i32) -> (i32, i32) {
    %c0_i32 = arith.constant 0 : i32
    return %arg0, %arg1 : i32, i32
  }
  func.func @transform_1(%arg0: i32, %arg1: i32) -> (i32, i32) {
    %c0_i32 = arith.constant 0 : i32
    return %arg0, %arg1 : i32, i32
  }
  func.func @transform_2(%arg0: i32, %arg1: i32) -> (i32, i32) {
    %c0_i32 = arith.constant 0 : i32
    %c0_i32_0 = arith.constant 0 : i32
    return %arg0, %c0_i32 : i32, i32
  }
  func.func @transform_3(%arg0: i32, %arg1: i32) -> (i32, i32) {
    %c0_i32 = arith.constant 0 : i32
    %c0_i32_0 = arith.constant 0 : i32
    return %arg0, %c0_i32 : i32, i32
  }
}

</mosaic_0001>

<llo_original>
// kernel: tpu_custom_call.1
$region0: #{tpu_custom_call.1}
  #allocation0 [shape = 'u32[]', space=smem, size = 0x4, offset = 0x4, fixed_abs, tag = 'smem constant byte address 0x4 - core index']
  #allocation1 [shape = 'u32[144,128]{1,0:T(1,128)}', space=vmem, size = 0x12000, scoped, tag = 'internal scratch']
  %s0 = inlined_call_operand.hbm [shape: f32[16,128], index: 0, kind: input, shape index: {}]
  %s1 = inlined_call_operand.hbm [shape: f32[16,128], index: 1, kind: input, shape index: {}]
  %s2 = inlined_call_operand.vmem [shape: f32[16,1], index: 2, kind: output, shape index: {0}]
  %s3 = inlined_call_operand.vmem [shape: f32[16,1], index: 3, kind: output, shape index: {1}]
  %4 = xla_tuple %s2, %s3
  %s5 = sld [smem:[#allocation0]]
  $region38: #{tpu_custom_call.1} parent=0
    _
  %s7 = ssub.s32 1, %s5
  %s8 = scalar_select 0, %s7, %s5
  $region1: #{tpu_custom_call.1} parent=0
    #allocation2 [shape = 'u8[8192]{0}', space=vmem, size = 0x2000, scoped, tag = 'input window, operand 0, single buffered']
    #allocation3 [shape = 's32[1]{0}', space=sflag, size = 0x4, scoped, tag = 'scoped memory for tpu_custom_call.1']
    #allocation4 [shape = 'u8[8192]{0}', space=vmem, size = 0x2000, scoped, tag = 'input window, operand 1, single buffered']
    #allocation5 [shape = 's32[1]{0}', space=sflag, size = 0x4, scoped, tag = 'scoped memory for tpu_custom_call.1']
    %9 = vsyncpa [#allocation3], 0
    %10 = vsyncpa [#allocation5], 0
    // Predicated region
    $region2: #{tpu_custom_call.1} parent=1 // pred_check
      _
    $region3: #{tpu_custom_call.1} parent=1 // pred_check_branch
      %12 = sbr.rel (0) target = $region5
    $region4: #{tpu_custom_call.1} parent=1 // pred_region
      %s14 = ssub.s32 256, 256
      %15 = vsyncadd [#allocation3], %s14
      %s16 = sshll.u32 [#allocation2], 4
      %s17 = int_to_ptr.vmem [resolvable:$true] %s16
      %22 = dma.hbm_to_vmem [thread:$0]  %s0, 256, %s17, [#allocation3], 128, 128, 8
    $region5: #{tpu_custom_call.1} parent=1 // pred_fallthru
      _
    // Predicated region
    $region6: #{tpu_custom_call.1} parent=1 // pred_check
      _
    $region7: #{tpu_custom_call.1} parent=1 // pred_check_branch
      %24 = sbr.rel (0) target = $region9
    $region8: #{tpu_custom_call.1} parent=1 // pred_region
      %s26 = ssub.s32 256, 256
      %27 = vsyncadd [#allocation5], %s26
      %s28 = sshll.u32 [#allocation4], 4
      %s29 = int_to_ptr.vmem [resolvable:$true] %s28
      %34 = dma.hbm_to_vmem [thread:$0]  %s1, 256, %s29, [#allocation5], 128, 128, 8
    $region9: #{tpu_custom_call.1} parent=1 // pred_fallthru
      _
    // Predicated region
    $region10: #{tpu_custom_call.1} parent=1 // pred_check
      _
    $region11: #{tpu_custom_call.1} parent=1 // pred_check_branch
      %36 = sbr.rel (0) target = $region13
    $region12: #{tpu_custom_call.1} parent=1 // pred_region
      %37 = dma.done [#allocation3], 256
    $region13: #{tpu_custom_call.1} parent=1 // pred_fallthru
      _
    // Predicated region
    $region14: #{tpu_custom_call.1} parent=1 // pred_check
      _
    $region15: #{tpu_custom_call.1} parent=1 // pred_check_branch
      %39 = sbr.rel (0) target = $region17
    $region16: #{tpu_custom_call.1} parent=1 // pred_region
      %40 = dma.done [#allocation5], 256
    $region17: #{tpu_custom_call.1} parent=1 // pred_fallthru
      _
    %p41 = scmp.eq.s32.totalorder 0, 0
    // Predicated region
    $region18: #{tpu_custom_call.1} parent=1 // pred_check
      %p42 = pneg %p41
    $region19: #{tpu_custom_call.1} parent=1 // pred_check_branch
      %44 = sbr.rel (%p42) target = $region21
    $region20: #{tpu_custom_call.1} parent=1 // pred_region
      %vm45 = vcmask 7168
      %46 = vst.msk [vmem:[%s2] sm:$0xff] %vm45, 0.0
      %47 = vst.msk [vmem:[%s2 + $0x8] sm:$0xff] %vm45, 0.0
      %48 = vst.msk [vmem:[%s3] sm:$0xff] %vm45, 0.0
      %49 = vst.msk [vmem:[%s3 + $0x8] sm:$0xff] %vm45, 0.0
    $region21: #{tpu_custom_call.1} parent=1 // pred_fallthru
      _
    %v50 = vld [vmem:[#allocation2] sm:$0xff]
    %v51 = vld [vmem:[#allocation2 + $0x8] sm:$0xff]
    %v52 = vld [vmem:[#allocation4] sm:$0xff]
    %v53 = vld [vmem:[#allocation4 + $0x8] sm:$0xff]
    %v54 = vld [vmem:[%s2] sm:$0xff]
    %v55 = vld [vmem:[%s2 + $0x8] sm:$0xff]
    %v56 = vmul.f32 %v50, %v52
    %v57 = vmul.f32 %v51, %v53
    %58 = vadd.xlane.f32.xlu0 %v56
    %v59 = vpop.xlane.xlu0 %58
    %60 = vadd.xlane.f32.xlu0 %v57
    %v61 = vpop.xlane.xlu0 %60
    %v62 = vadd.f32 %v54, %v59
    %v63 = vadd.f32 %v55, %v61
    %vm64 = vcmask 7168
    %65 = vst.msk [vmem:[%s2] sm:$0xff] %vm64, %v62
    %66 = vst.msk [vmem:[%s2 + $0x8] sm:$0xff] %vm64, %v63
    %v67 = vld [vmem:[%s3] sm:$0xff]
    %v68 = vld [vmem:[%s3 + $0x8] sm:$0xff]
    %v69 = vadd.f32 %v50, %v52
    %v70 = vadd.f32 %v51, %v53
    %71 = vadd.xlane.f32.xlu0 %v69
    %v72 = vpop.xlane.xlu0 %71
    %73 = vadd.xlane.f32.xlu0 %v70
    %v74 = vpop.xlane.xlu0 %73
    %v75 = vadd.f32 %v67, %v72
    %v76 = vadd.f32 %v68, %v74
    %77 = vst.msk [vmem:[%s3] sm:$0xff] %vm64, %v75
    %78 = vst.msk [vmem:[%s3 + $0x8] sm:$0xff] %vm64, %v76
    // Predicated region
    $region22: #{tpu_custom_call.1} parent=1 // pred_check
      _
    $region23: #{tpu_custom_call.1} parent=1 // pred_check_branch
      %80 = sbr.rel (0) target = $region25
    $region24: #{tpu_custom_call.1} parent=1 // pred_region
      _
    $region25: #{tpu_custom_call.1} parent=1 // pred_fallthru
      _
    // Predicated region
    $region26: #{tpu_custom_call.1} parent=1 // pred_check
      _
    $region27: #{tpu_custom_call.1} parent=1 // pred_check_branch
      %82 = sbr.rel (0) target = $region29
    $region28: #{tpu_custom_call.1} parent=1 // pred_region
      _
    $region29: #{tpu_custom_call.1} parent=1 // pred_fallthru
      _
    // Predicated region
    $region30: #{tpu_custom_call.1} parent=1 // pred_check
      _
    $region31: #{tpu_custom_call.1} parent=1 // pred_check_branch
      %84 = sbr.rel (0) target = $region33
    $region32: #{tpu_custom_call.1} parent=1 // pred_region
      _
    $region33: #{tpu_custom_call.1} parent=1 // pred_fallthru
      _
    // Predicated region
    $region34: #{tpu_custom_call.1} parent=1 // pred_check
      _
    $region35: #{tpu_custom_call.1} parent=1 // pred_check_branch
      %86 = sbr.rel (0) target = $region37
    $region36: #{tpu_custom_call.1} parent=1 // pred_region
      _
    $region37: #{tpu_custom_call.1} parent=1 // pred_fallthru
      _
    %87 = vsyncpa [#allocation3], 1
    %88 = vsyncpa [#allocation5], 1

</llo_original>
